<compile_context>
chip_gen: v7x
topology: tpu7x:2x2x1
jax: 0.10.0
libtpu: 0.0.40
codegen_flags: <defaults>
</compile_context>

<pallas_src>
import functools

import jax
import jax.numpy as jnp
from jax.experimental import pallas as pl
from jax.experimental.pallas import tpu as pltpu

_LANE = 128
_LANE_CAP = 4096                     # widest lane-dense last dim we try for
_CHUNK_BYTES = 16 * 1024 * 1024      # per-DMA chunk (HBM->HBM, no VMEM staging)
_MIN_SPLIT_BYTES = 8 * 1024 * 1024   # force >= 2 grid steps above this (v7x megacore)


def _sublane_for_dtype(dtype) -> int:
    itemsize = jnp.dtype(dtype).itemsize
    if itemsize >= 4:
        return 8
    if itemsize == 2:
        return 16
    return 32


def _largest_lane_dim(n: int, cap: int = _LANE_CAP):
    """Largest multiple of 128 (<= cap) that divides n, or None."""
    best = None
    c = _LANE
    while c <= cap:
        if n % c == 0:
            best = c
        c += _LANE
    return best


def _dma_copy_kernel(x_hbm, o_hbm, sem, *, block_rows, nfull, rem):
    """Chunked HBM->HBM identity copy: one DMA per grid step."""
    i = pl.program_id(0)

    @pl.when(i < nfull)
    def _():
        start = i * block_rows
        cp = pltpu.make_async_copy(
            x_hbm.at[pl.ds(start, block_rows)],
            o_hbm.at[pl.ds(start, block_rows)],
            sem,
        )
        cp.start()
        cp.wait()

    if rem:  # static Python int -> ragged tail handled with a static-size DMA
        @pl.when(i == nfull)
        def _():
            start = nfull * block_rows
            cp = pltpu.make_async_copy(
                x_hbm.at[pl.ds(start, rem)],
                o_hbm.at[pl.ds(start, rem)],
                sem,
            )
            cp.start()
            cp.wait()


@functools.partial(jax.jit, static_argnames=("target",))
def _materialized_reshape(x: jax.Array, target) -> jax.Array:
    """Reshape into a freshly materialized buffer via HBM->HBM DMA."""
    n = x.size
    if n == 0:
        return x.reshape(target)

    flat = x.reshape(-1)  # row-major flat order == torch .contiguous().view(-1)

    lanes = _largest_lane_dim(n)
    if lanes is None:
        # No lane-dense 2D layout without padding; a contiguous reshape is
        # metadata-only anyway, so nothing is worth copying with a kernel.
        return flat.reshape(target)

    rows = n // lanes
    dtype = flat.dtype
    itemsize = jnp.dtype(dtype).itemsize
    sub = _sublane_for_dtype(dtype)

    row_bytes = lanes * itemsize
    total_bytes = rows * row_bytes

    # ~16 MiB chunks, rounded down to a sublane multiple where possible.
    block_rows = max(1, _CHUNK_BYTES // row_bytes)
    if block_rows >= sub:
        block_rows = (block_rows // sub) * sub
    block_rows = min(block_rows, rows)

    # Guarantee >= 2 grid steps for mid/large arrays so both v7x TensorCores
    # (dimension_semantics="parallel") drive their own DMA streams.
    if total_bytes > _MIN_SPLIT_BYTES and rows // block_rows < 2:
        half = max(1, rows // 2)
        if half >= sub:
            half = (half // sub) * sub
        block_rows = half

    nfull = rows // block_rows
    rem = rows - nfull * block_rows
    grid = (nfull + (1 if rem else 0),)

    x2d = flat.reshape(rows, lanes)

    out2d = pl.pallas_call(
        functools.partial(
            _dma_copy_kernel, block_rows=block_rows, nfull=nfull, rem=rem
        ),
        out_shape=jax.ShapeDtypeStruct((rows, lanes), dtype),
        grid=grid,
        in_specs=[pl.BlockSpec(memory_space=pl.ANY)],   # raw HBM ref, no auto-DMA
        out_specs=pl.BlockSpec(memory_space=pl.ANY),    # raw HBM ref, no auto-DMA
        scratch_shapes=[pltpu.SemaphoreType.DMA(())],
        compiler_params=pltpu.CompilerParams(
            dimension_semantics=("parallel",),
        ),
    )(x2d)

    return out2d.reshape(target)


class Reshape:
    """JAX/Pallas port of the PyTorch Reshape nn.Module (view on the fly).

    Default path is metadata-only (exactly .view() semantics, zero HBM
    traffic).  Pass materialize=True to force a fresh buffer via the chunked
    HBM->HBM DMA Pallas kernel.
    """

    def __init__(self, *target_shape, materialize: bool = False):
        self.target_shape = target_shape
        self.materialize = materialize

    def _resolve_shape(self, n_elems: int):
        shape = list(self.target_shape)
        if -1 in shape:
            idx = shape.index(-1)
            known = 1
            for j, s in enumerate(shape):
                if j != idx:
                    known *= s
            shape[idx] = n_elems // known
        return tuple(int(s) for s in shape)

    def __call__(self, x: jax.Array) -> jax.Array:
        target = self._resolve_shape(x.size)
        if self.materialize:
            return _materialized_reshape(x, target)
        # Metadata-only contiguous reshape: fastest possible implementation
        # on every TPU generation (review-recommended default).
        return jnp.reshape(x, target)


if __name__ == "__main__":
    key = jax.random.PRNGKey(0)

    # Small NCHW input consistent with a VAE conv feature map.
    x = jax.random.normal(key, (2, 4, 16, 16), dtype=jnp.float32)
    ref = x.reshape(-1, 4 * 16 * 16)

    # Default (metadata-only) path: exactly x.view(-1, C*H*W).
    y = jax.block_until_ready(Reshape(-1, 4 * 16 * 16)(x))
    assert y.shape == (2, 1024), y.shape
    assert y.dtype == x.dtype
    assert bool(jnp.array_equal(y, ref))

    # Materialized path exercises the HBM->HBM DMA Pallas kernel.
    ym = jax.block_until_ready(Reshape(-1, 4 * 16 * 16, materialize=True)(x))
    assert ym.shape == (2, 1024), ym.shape
    assert ym.dtype == x.dtype
    assert bool(jnp.array_equal(ym, ref))

    # bf16 input exercises the dtype-aware chunking path through the kernel.
    xb = jax.random.normal(key, (2, 8, 16, 16), dtype=jnp.bfloat16)
    yb = jax.block_until_ready(Reshape(2, -1, materialize=True)(xb))
    assert yb.shape == (2, 8 * 16 * 16)
    assert bool(jnp.array_equal(yb, xb.reshape(2, -1)))

    # Non-128-divisible element count uses the metadata-only view.
    xo = jax.random.normal(key, (3, 5, 7), dtype=jnp.float32)
    yo = jax.block_until_ready(Reshape(-1, 7)(xo))
    assert yo.shape == (15, 7)
    assert bool(jnp.array_equal(yo, xo.reshape(-1, 7)))

    print("KERNEL_OK")
</pallas_src>

<mosaic_0001>
module attributes {stable_mosaic.version = 11 : i64} {
  func.func @_dma_copy_kernel(%arg0: i32, %arg1: memref<1x2048xf32, #tpu.memory_space<any>>, %arg2: memref<1x2048xf32, #tpu.memory_space<any>>, %arg3: memref<!tpu.dma_semaphore, #tpu.memory_space<semaphore_mem>>) attributes {dimension_semantics = [#tpu.dimension_semantics<parallel>], iteration_bounds = array<i64: 1>, scalar_prefetch = 0 : i64, scratch_operands = 1 : i64, tpu.core_type = #tpu.core_type<tc>, window_params = [{}, {}]} {
    %c1_i32 = arith.constant 1 : i32
    %0 = arith.cmpi slt, %arg0, %c1_i32 : i32
    %1 = arith.extui %0 : i1 to i32
    %c0_i32 = arith.constant 0 : i32
    %2 = arith.cmpi ne, %1, %c0_i32 : i32
    scf.if %2 {
      %c1_i32_0 = arith.constant 1 : i32
      %3 = arith.muli %arg0, %c1_i32_0 : i32
      %c0_i32_1 = arith.constant 0 : i32
      %4 = tpu.memref_slice %arg1[%3, %c0_i32_1] : memref<1x2048xf32, #tpu.memory_space<any>> -> memref<1x2048xf32, #tpu.memory_space<any>>
      %c0_i32_2 = arith.constant 0 : i32
      %5 = tpu.memref_slice %arg2[%3, %c0_i32_2] : memref<1x2048xf32, #tpu.memory_space<any>> -> memref<1x2048xf32, #tpu.memory_space<any>>
      tpu.enqueue_dma source(%4 : memref<1x2048xf32, #tpu.memory_space<any>>) target(%5 : memref<1x2048xf32, #tpu.memory_space<any>>) target_semaphore(%arg3 : memref<!tpu.dma_semaphore, #tpu.memory_space<semaphore_mem>>)
      %c0_i32_3 = arith.constant 0 : i32
      %6 = tpu.memref_slice %arg1[%3, %c0_i32_3] : memref<1x2048xf32, #tpu.memory_space<any>> -> memref<1x2048xf32, #tpu.memory_space<any>>
      %c0_i32_4 = arith.constant 0 : i32
      %7 = tpu.memref_slice %arg2[%3, %c0_i32_4] : memref<1x2048xf32, #tpu.memory_space<any>> -> memref<1x2048xf32, #tpu.memory_space<any>>
      tpu.wait_dma2 semaphore(%arg3 : memref<!tpu.dma_semaphore, #tpu.memory_space<semaphore_mem>>) src(%6 : memref<1x2048xf32, #tpu.memory_space<any>>) dst(%7 : memref<1x2048xf32, #tpu.memory_space<any>>)
    } else {
    }
    return
  }
}

</mosaic_0001>

<llo_original>
// kernel: _materialized_reshape.1
$region0: #{_materialized_reshape.1}
  #allocation0 [shape = 'u32[]', space=smem, size = 0x4, offset = 0x4, fixed_abs, tag = 'smem constant byte address 0x4 - core index']
  #allocation1 [shape = 'u32[144,128]{1,0:T(1,128)}', space=vmem, size = 0x12000, scoped, tag = 'internal scratch']
  #allocation2 [shape = 's32[1]{0}', space=sflag, size = 0x4, scoped, tag = 'scratch operand']
  #allocation3 [shape = 's32[]', space=sflag, size = 0x4, offset = 0, fixed_abs, tag = 'sflag constant byte address 0x0 - dummy sync flag']
  %s0 = inlined_call_operand.vmem [shape: f32[1,2048], index: 0, kind: input, shape index: {}]
  %s1 = inlined_call_operand.vmem [shape: f32[1,2048], index: 1, kind: output, shape index: {}]
  %s2 = sld [smem:[#allocation0]]
  $region40: #{_materialized_reshape.1} parent=0
    _
  %s4 = ssub.s32 1, %s2
  %s5 = scalar_select 0, %s4, %s2
  %p6 = scmp.lt.s32.totalorder 0, 1
  // Predicated region
  $region2: #{_materialized_reshape.1} parent=0 // pred_check
    %p7 = pneg %p6
  $region3: #{_materialized_reshape.1} parent=0 // pred_check_branch
    %9 = sbr.rel (%p7) target = $region5
  $region4: #{_materialized_reshape.1} parent=0 // pred_region
    %s10 = smul.u32 0, 16
    %s11 = scalar_lea.vmem %s0, %s10
    %s12 = scalar_lea.vmem %s1, %s10
    %p14 = scmp.lt.u32.totalorder 16, 8
    %p15 = pneg %p14
    // Predicated region
    $region6: #{_materialized_reshape.1} parent=4 // pred_check
      _
    $region7: #{_materialized_reshape.1} parent=4 // pred_check_branch
      %17 = sbr.rel (%p14) target = $region9
    $region8: #{_materialized_reshape.1} parent=4 // pred_region
      %s32 = sand.u32 16, 7
      %p33 = scmp.eq.s32.totalorder %s32, 0
      // Predicated region
      $region21: #{_materialized_reshape.1} parent=8 // pred_check
        %p34 = pneg %p33
      $region22: #{_materialized_reshape.1} parent=8 // pred_check_branch
        %36 = sbr.rel (%p34) target = $region24
      $region23: #{_materialized_reshape.1} parent=8 // pred_region
        loop: start=0, step=1, limit=1
        $region25: #{_materialized_reshape.1} parent=23 // loop_pre_header
          _
        $region26: #{_materialized_reshape.1} parent=23 // loop_header
          %s38 = sphi 0, %s42
          %p39 = scmp.ge.s32.totalorder %s38, 1
          %s43 = sphi %s11, %s11
          %s44 = sphi %s12, %s12
        $region27: #{_materialized_reshape.1} parent=23 // loop_header_branch
          %41 = sbr.rel (%p39) target = $region31
        $region28: #{_materialized_reshape.1} parent=23 // loop_body
          %v45 = vld [vmem:[%s43] sm:$0xff]
          %46 = vst [vmem:[%s44] sm:$0xff] %v45
          %v47 = vld [vmem:[%s43 + $0x8] sm:$0xff]
          %48 = vst [vmem:[%s44 + $0x8] sm:$0xff] %v47
        $region29: #{_materialized_reshape.1} parent=23 // loop_footer
          %s42 = sadd.s32 1, %s38
        $region30: #{_materialized_reshape.1} parent=23 // loop_footer_branch
          %37 = sbr.rel target = $region26
        $region31: #{_materialized_reshape.1} parent=23 // loop_exit
          _
      $region24: #{_materialized_reshape.1} parent=8 // pred_fallthru
        _
      %p49 = pneg %p33
      // Predicated region
      $region32: #{_materialized_reshape.1} parent=8 // pred_check
        _
      $region33: #{_materialized_reshape.1} parent=8 // pred_check_branch
        %51 = sbr.rel (%p33) target = $region35
      $region34: #{_materialized_reshape.1} parent=8 // pred_region
        %s52 = sand.u32 16, 7
      $region35: #{_materialized_reshape.1} parent=8 // pred_fallthru
        _
    $region9: #{_materialized_reshape.1} parent=4 // pred_fallthru
      _
    // Predicated region
    $region10: #{_materialized_reshape.1} parent=4 // pred_check
      %p18 = pneg %p14
    $region11: #{_materialized_reshape.1} parent=4 // pred_check_branch
      %20 = sbr.rel (%p18) target = $region13
    $region12: #{_materialized_reshape.1} parent=4 // pred_region
      %s21 = sshllo.u32 0, 16
      loop: start=0, step=1, limit=1
      $region14: #{_materialized_reshape.1} parent=12 // loop_pre_header
        _
      $region15: #{_materialized_reshape.1} parent=12 // loop_header
        %s23 = sphi 0, %s27
        %p24 = scmp.ge.s32.totalorder %s23, 1
        %s28 = sphi %s11, %s11
        %s29 = sphi %s12, %s12
      $region16: #{_materialized_reshape.1} parent=12 // loop_header_branch
        %26 = sbr.rel (%p24) target = $region20
      $region17: #{_materialized_reshape.1} parent=12 // loop_body
        %v30 = vld [vmem:[%s28] sm:%s21]
        %31 = vst [vmem:[%s29] sm:%s21] %v30
      $region18: #{_materialized_reshape.1} parent=12 // loop_footer
        %s27 = sadd.s32 1, %s23
      $region19: #{_materialized_reshape.1} parent=12 // loop_footer_branch
        %22 = sbr.rel target = $region15
      $region20: #{_materialized_reshape.1} parent=12 // loop_exit
        _
    $region13: #{_materialized_reshape.1} parent=4 // pred_fallthru
      _
    // Predicated region
    $region36: #{_materialized_reshape.1} parent=4 // pred_check
      _
    $region37: #{_materialized_reshape.1} parent=4 // pred_check_branch
      %55 = sbr.rel (0) target = $region39
    $region38: #{_materialized_reshape.1} parent=4 // pred_region
      %56 = vsyncadd [#allocation2], 256
    $region39: #{_materialized_reshape.1} parent=4 // pred_fallthru
      _
    %s57 = smul.u32 1, 16
    %s58 = sshll.u32 %s57, 4
    %59 = dma.done [#allocation2], %s58
  $region5: #{_materialized_reshape.1} parent=0 // pred_fallthru
    _
  %60 = vsyncmov [#allocation2]
  %s61 = vpop.sfrf %60
  %p62 = scmp.eq.s32.totalorder %s61, 0
  %p63 = pneg %p62
  %65 = shalt.err (%p63)

</llo_original>
